<compile_context>
chip_gen: v7x
topology: tpu7x:2x2x1
jax: 0.10.0
libtpu: 0.0.40
codegen_flags: <defaults>
</compile_context>

<pallas_src>
import functools

import jax
import jax.numpy as jnp
import numpy as np
from jax import lax
from jax.experimental import pallas as pl
from jax.experimental.pallas import tpu as pltpu


_MIB = 1024 * 1024


def _round_up(v, m):
    return -(-v // m) * m


def _vmem_limit_bytes():
    """Generation-aware scoped-VMEM limit: half of physical, clamped 32..64 MiB.

    v5e/v6e (128 MiB physical) -> 64 MiB, v7x (64 MiB physical) -> 32 MiB.
    """
    try:
        cap = int(pltpu.get_tpu_info().vmem_capacity_bytes)
    except Exception:
        cap = 64 * _MIB
    return int(min(64 * _MIB, max(32 * _MIB, cap // 2)))


def _pick_block_rows(rows, c5, hw, transpose_out, budget_bytes):
    """Largest divisor R of `rows` whose double-buffered working set fits the
    budget, capped so the 'parallel' grid axis has >= 2 steps (v7x megacore).

    Accounts for the real padded tile sizes: channel-major tiles pad sublanes
    to 8, torch-layout tiles pad their (C5 / 4)-wide lane dim to 128.
    """
    hw_lane = _round_up(hw, 128)
    c5_sub = _round_up(c5, 8)
    in_bytes = c5_sub * hw_lane * 4                       # raw prediction tile
    if transpose_out:
        hw_sub = _round_up(hw, 8)
        out_bytes = 2 * hw_sub * 128 * 4                  # (hw,C5) + (hw,4), lanes pad to 128
    else:
        out_bytes = (c5_sub + 8) * hw_lane * 4            # (C5,hw) + (4,hw)
    per_row = 2 * (in_bytes + out_bytes)                  # x2 double buffering
    r_max = max(1, budget_bytes // per_row)
    if rows >= 2:
        r_max = min(r_max, rows // 2)                     # >= 2 parallel grid steps
    r_max = max(1, min(r_max, rows))
    for r in range(r_max, 0, -1):
        if rows % r == 0:
            return r
    return 1


def _decoder_kernel(g4_ref, comb_ref, x_ref, xout_ref, bbox_ref, *, transpose_out):
    """Decode one block of R rows (row = batch_index * num_anchors + anchor).

    g4_ref   : (1, 4, hw)  f32   rows = [gx, gy, 0, 0]         (VMEM resident)
    comb_ref : (R, 4, 1)   f32   rows = [1/w, 1/h, aw/in_w, ah/in_h]
    x_ref    : (R, C5, hw) src dtype   raw predictions, channel-major
    xout_ref : transpose_out -> (R, hw, C5) else (R, C5, hw)
    bbox_ref : transpose_out -> (R, hw, 4)  else (R, 4, hw)
    """
    x = x_ref[...].astype(jnp.float32)                    # (R, C5, hw)

    # Exact sigmoid (matches torch.sigmoid within f32 rounding).  Computed once
    # on the full tile; EUP work is hidden behind HBM on this mem-bound kernel.
    sig = 1.0 / (1.0 + jnp.exp(-x))

    # Decoded feature map: sigmoid everywhere except the raw tw/th channels,
    # assembled with a single wide select -> single full-tile store (no
    # partial store train).
    ch = lax.broadcasted_iota(jnp.int32, x.shape, 1)
    keep_raw = (ch >= 2) & (ch < 4)
    xdec = jnp.where(keep_raw, x, sig)

    # bbox: channels 0..3 in one 4-sublane-wide op, single store.
    #   rows 0,1: (sigmoid(txy) + grid) * (1/w, 1/h)
    #   rows 2,3: exp(twh) * (anchor / in_size)
    bxy_or_bwh = jnp.where(ch[:, 0:4, :] < 2,
                           sig[:, 0:4, :] + g4_ref[...],
                           jnp.exp(x[:, 0:4, :]))
    bbox4 = bxy_or_bwh * comb_ref[...]

    if transpose_out:
        # Produce torch layout in-VMEM (tile transpose on the otherwise-idle
        # XLU/MXU path) so no extra HBM pass is needed after the kernel.
        xout_ref[...] = jnp.swapaxes(xdec, 1, 2).astype(xout_ref.dtype)
        bbox_ref[...] = jnp.swapaxes(bbox4, 1, 2).astype(bbox_ref.dtype)
    else:
        xout_ref[...] = xdec.astype(xout_ref.dtype)
        bbox_ref[...] = bbox4.astype(bbox_ref.dtype)


def _call_decoder(x_flat, g4, comb, rows, C5, hw, R, transpose_out, out_dtype):
    kernel = functools.partial(_decoder_kernel, transpose_out=transpose_out)
    if transpose_out:
        out_shape = [jax.ShapeDtypeStruct((rows, hw, C5), out_dtype),
                     jax.ShapeDtypeStruct((rows, hw, 4), out_dtype)]
        out_specs = [pl.BlockSpec((R, hw, C5), lambda i: (i, 0, 0)),
                     pl.BlockSpec((R, hw, 4), lambda i: (i, 0, 0))]
    else:
        out_shape = [jax.ShapeDtypeStruct((rows, C5, hw), out_dtype),
                     jax.ShapeDtypeStruct((rows, 4, hw), out_dtype)]
        out_specs = [pl.BlockSpec((R, C5, hw), lambda i: (i, 0, 0)),
                     pl.BlockSpec((R, 4, hw), lambda i: (i, 0, 0))]
    return pl.pallas_call(
        kernel,
        grid=(rows // R,),
        in_specs=[
            pl.BlockSpec((1, 4, hw), lambda i: (0, 0, 0)),    # cell offsets (resident)
            pl.BlockSpec((R, 4, 1), lambda i: (i, 0, 0)),     # per-row combined scales
            pl.BlockSpec((R, C5, hw), lambda i: (i, 0, 0)),   # raw predictions
        ],
        out_specs=out_specs,
        out_shape=out_shape,
        compiler_params=pltpu.CompilerParams(
            dimension_semantics=("parallel",),
            vmem_limit_bytes=_vmem_limit_bytes()),
    )(g4, comb, x_flat)


# Cache: shape-signature -> whether the in-kernel (torch-layout) transpose
# lowered successfully.  On lowering failure we fall back (per shape) to the
# channel-major kernel + one XLA transpose pass.
_TRANSPOSE_IN_KERNEL_OK = {}


def decode_scale(x, anchors_masked, in_size, num_classes, torch_layout=True):
    """x: (n, c, h, w) NCHW, c == A * (5 + num_classes). Returns (bbox, x_dec).

    torch_layout=True  -> bbox (n, A, h, w, 4), x_dec (n, A, h, w, 5+C)
    torch_layout=False -> channel-first (n, A, 4, h, w) / (n, A, 5+C, h, w)
                          (fast path for layout-agnostic consumers).
    """
    n, c, h, w = x.shape
    A = int(anchors_masked.shape[0])
    C5 = 5 + num_classes
    assert c == A * C5, (c, A, C5)
    hw = h * w
    rows = n * A
    out_dtype = x.dtype

    # Native-dtype ingestion: no pre-kernel astype; free contiguous view.
    x_flat = x.reshape(rows, C5, hw)

    # Cell-offset rows [gx, gy, 0, 0]; VMEM-resident across all grid steps.
    lin = np.arange(hw)
    g4_np = np.zeros((1, 4, hw), np.float32)
    g4_np[0, 0, :] = (lin % w).astype(np.float32)
    g4_np[0, 1, :] = (lin // w).astype(np.float32)
    g4 = jnp.asarray(g4_np)

    # Per-row combined multipliers [1/w, 1/h, aw/in_w, ah/in_h] (row = b*A + a):
    # all constant divides folded into one multiply inside the kernel.
    anch = anchors_masked.astype(jnp.float32) / jnp.asarray(
        [float(in_size[1]), float(in_size[0])], dtype=jnp.float32)       # (A, 2)
    inv_wh = jnp.broadcast_to(
        jnp.asarray([1.0 / w, 1.0 / h], dtype=jnp.float32), (A, 2))
    comb = jnp.tile(jnp.concatenate([inv_wh, anch], axis=1),
                    (n, 1)).reshape(rows, 4, 1)

    budget = _vmem_limit_bytes() // 2

    def run(transpose_out):
        R = _pick_block_rows(rows, C5, hw, transpose_out, budget)
        return _call_decoder(x_flat, g4, comb, rows, C5, hw, R,
                             transpose_out, out_dtype)

    if not torch_layout:
        xo, bb = run(False)
        return (bb.reshape(n, A, 4, h, w), xo.reshape(n, A, C5, h, w))

    sig_key = (rows, C5, h, w, str(out_dtype))
    if _TRANSPOSE_IN_KERNEL_OK.get(sig_key, True):
        try:
            xo, bb = jax.block_until_ready(run(True))
            _TRANSPOSE_IN_KERNEL_OK[sig_key] = True
            return (bb.reshape(n, A, h, w, 4), xo.reshape(n, A, h, w, C5))
        except Exception:
            # Mosaic could not lower the in-tile transpose for this shape;
            # fall back to channel-major outputs + one XLA transpose pass.
            _TRANSPOSE_IN_KERNEL_OK[sig_key] = False

    xo, bb = run(False)
    x_out = xo.reshape(n, A, C5, h, w).transpose(0, 1, 3, 4, 2)
    bbox = bb.reshape(n, A, 4, h, w).transpose(0, 1, 3, 4, 2)
    return (bbox, x_out)


class YOLOv3DecoderPallas:
    ANCHOR_MASKS = ((6, 7, 8), (3, 4, 5), (0, 1, 2))

    def __init__(self, in_size, num_classes, anchors):
        self.in_size = in_size
        self.num_classes = num_classes
        self.anchors = jnp.asarray(anchors, dtype=jnp.float32)   # (9, 2)

    def __call__(self, xs, torch_layout=True):
        # TODO(synk): fuse the three scales into a single pallas_call (extra
        # grid axis + scalar-prefetched per-scale offsets) to amortize launch
        # overhead on the tiny 13x13 / 26x26 scales.
        outs = []
        for x, mask in zip(xs, self.ANCHOR_MASKS):
            anch = self.anchors[jnp.asarray(mask), :]
            outs.append(decode_scale(x, anch, self.in_size, self.num_classes,
                                     torch_layout=torch_layout))
        return outs


# ------------------------- pure-numpy reference -------------------------
def _ref_decode(x, anchors_masked, in_size, num_classes):
    x = np.asarray(x, dtype=np.float32)
    anchors_masked = np.asarray(anchors_masked, dtype=np.float32)
    n, c, h, w = x.shape
    A = anchors_masked.shape[0]
    C5 = 5 + num_classes
    xv = x.reshape(n, A, C5, h, w).transpose(0, 1, 3, 4, 2).copy()
    sig = lambda v: 1.0 / (1.0 + np.exp(-v))
    xv[..., :2] = sig(xv[..., :2])
    xv[..., 4:] = sig(xv[..., 4:])
    gy, gx = np.meshgrid(np.arange(h), np.arange(w), indexing="ij")
    gx = gx.reshape(1, 1, h, w).astype(np.float32)
    gy = gy.reshape(1, 1, h, w).astype(np.float32)
    bx = (xv[..., 0] + gx) / w
    by = (xv[..., 1] + gy) / h
    aw = anchors_masked[:, 0].reshape(1, A, 1, 1)
    ah = anchors_masked[:, 1].reshape(1, A, 1, 1)
    bw = np.exp(xv[..., 2]) * aw / in_size[1]
    bh = np.exp(xv[..., 3]) * ah / in_size[0]
    bbox = np.stack([bx, by, bw, bh], axis=-1)
    return bbox, xv


if __name__ == "__main__":
    num_classes = 4
    in_size = (416, 416)
    anchors = [(10, 13), (16, 30), (33, 23),
               (30, 61), (62, 45), (59, 119),
               (116, 90), (156, 198), (373, 326)]

    key = jax.random.PRNGKey(0)
    n = 2
    c = 3 * (5 + num_classes)          # 27 channels per scale
    spatial = (4, 8, 16)               # three small scales (coarse -> fine)
    keys = jax.random.split(key, len(spatial))
    xs = [jax.random.normal(k, (n, c, s, s), dtype=jnp.float32)
          for k, s in zip(keys, spatial)]

    decoder = YOLOv3DecoderPallas(in_size, num_classes, anchors)
    outs = decoder(xs)
    outs = jax.block_until_ready(outs)

    # verify against reference
    masks = YOLOv3DecoderPallas.ANCHOR_MASKS
    anchors_np = np.asarray(anchors, dtype=np.float32)
    for (bbox, x_dec), x_in, mask in zip(outs, xs, masks):
        ref_bbox, ref_x = _ref_decode(np.asarray(x_in), anchors_np[list(mask)],
                                      in_size, num_classes)
        np.testing.assert_allclose(np.asarray(bbox), ref_bbox, rtol=1e-5, atol=1e-5)
        np.testing.assert_allclose(np.asarray(x_dec), ref_x, rtol=1e-5, atol=1e-5)

    print("KERNEL_OK")
</pallas_src>

<mosaic_0001>
module attributes {stable_mosaic.version = 11 : i64} {
  func.func @_decoder_kernel(%arg0: i32, %arg1: memref<1x4x16xf32, #tpu.memory_space<vmem>>, %arg2: memref<3x4x1xf32, #tpu.memory_space<vmem>>, %arg3: memref<3x9x16xf32, #tpu.memory_space<vmem>>, %arg4: memref<3x16x9xf32, #tpu.memory_space<vmem>>, %arg5: memref<3x16x4xf32, #tpu.memory_space<vmem>>) attributes {dimension_semantics = [#tpu.dimension_semantics<parallel>], iteration_bounds = array<i64: 2>, scalar_prefetch = 0 : i64, scratch_operands = 0 : i64, tpu.core_type = #tpu.core_type<tc>, window_params = [{pipeline_mode = #tpu.pipeline_mode<synchronous>, transform_indices = @transform_0, window_bounds = array<i64: 1, 4, 16>}, {transform_indices = @transform_1, window_bounds = array<i64: 3, 4, 1>}, {transform_indices = @transform_2, window_bounds = array<i64: 3, 9, 16>}, {transform_indices = @transform_3, window_bounds = array<i64: 3, 16, 9>}, {transform_indices = @transform_4, window_bounds = array<i64: 3, 16, 4>}]} {
    %c0 = arith.constant 0 : index
    %c0_0 = arith.constant 0 : index
    %c0_1 = arith.constant 0 : index
    %0 = vector.load %arg3[%c0, %c0_0, %c0_1] : memref<3x9x16xf32, #tpu.memory_space<vmem>>, vector<3x9x16xf32>
    %cst = arith.constant 0.000000e+00 : f32
    %1 = vector.broadcast %cst : f32 to vector<3x9x16xf32>
    %2 = arith.subf %1, %0 : vector<3x9x16xf32>
    %3 = math.exp %2 : vector<3x9x16xf32>
    %cst_2 = arith.constant 1.000000e+00 : f32
    %4 = vector.broadcast %cst_2 : f32 to vector<3x9x16xf32>
    %5 = arith.addf %4, %3 : vector<3x9x16xf32>
    %cst_3 = arith.constant 1.000000e+00 : f32
    %6 = vector.broadcast %cst_3 : f32 to vector<3x9x16xf32>
    %7 = arith.divf %6, %5 : vector<3x9x16xf32>
    %8 = tpu.iota {dimensions = array<i32: 1>} : vector<3x9x16xi32>
    %c2_i32 = arith.constant 2 : i32
    %9 = vector.broadcast %c2_i32 : i32 to vector<3x9x16xi32>
    %10 = arith.cmpi sge, %8, %9 : vector<3x9x16xi32>
    %c4_i32 = arith.constant 4 : i32
    %11 = vector.broadcast %c4_i32 : i32 to vector<3x9x16xi32>
    %12 = arith.cmpi slt, %8, %11 : vector<3x9x16xi32>
    %13 = arith.andi %10, %12 : vector<3x9x16xi1>
    %14 = arith.select %13, %0, %7 : vector<3x9x16xi1>, vector<3x9x16xf32>
    %15 = vector.extract_strided_slice %8 {offsets = [0, 0, 0], sizes = [3, 4, 16], strides = [1, 1, 1]} : vector<3x9x16xi32> to vector<3x4x16xi32>
    %c2_i32_4 = arith.constant 2 : i32
    %16 = vector.broadcast %c2_i32_4 : i32 to vector<3x4x16xi32>
    %17 = arith.cmpi slt, %15, %16 : vector<3x4x16xi32>
    %18 = vector.extract_strided_slice %7 {offsets = [0, 0, 0], sizes = [3, 4, 16], strides = [1, 1, 1]} : vector<3x9x16xf32> to vector<3x4x16xf32>
    %c0_5 = arith.constant 0 : index
    %c0_6 = arith.constant 0 : index
    %c0_7 = arith.constant 0 : index
    %19 = vector.load %arg1[%c0_5, %c0_6, %c0_7] : memref<1x4x16xf32, #tpu.memory_space<vmem>>, vector<1x4x16xf32>
    %20 = vector.broadcast %19 : vector<1x4x16xf32> to vector<3x4x16xf32>
    %21 = arith.addf %18, %20 : vector<3x4x16xf32>
    %22 = vector.extract_strided_slice %0 {offsets = [0, 0, 0], sizes = [3, 4, 16], strides = [1, 1, 1]} : vector<3x9x16xf32> to vector<3x4x16xf32>
    %23 = math.exp %22 : vector<3x4x16xf32>
    %24 = arith.select %17, %21, %23 : vector<3x4x16xi1>, vector<3x4x16xf32>
    %c0_8 = arith.constant 0 : index
    %c0_9 = arith.constant 0 : index
    %c0_10 = arith.constant 0 : index
    %25 = vector.load %arg2[%c0_8, %c0_9, %c0_10] : memref<3x4x1xf32, #tpu.memory_space<vmem>>, vector<3x4x1xf32>
    %26 = vector.broadcast %25 : vector<3x4x1xf32> to vector<3x4x16xf32>
    %27 = arith.mulf %24, %26 : vector<3x4x16xf32>
    %28 = tpu.transpose %14, [0, 2, 1] : vector<3x9x16xf32> -> vector<3x16x9xf32>
    %c0_11 = arith.constant 0 : index
    %c0_12 = arith.constant 0 : index
    %c0_13 = arith.constant 0 : index
    %29 = vector.load %arg4[%c0_11, %c0_12, %c0_13] : memref<3x16x9xf32, #tpu.memory_space<vmem>>, vector<3x16x9xf32>
    tpu.vector_store %arg4[%c0_11, %c0_12, %c0_13], %28 {strides = array<i32>} : memref<3x16x9xf32, #tpu.memory_space<vmem>>, vector<3x16x9xf32>,
    %30 = tpu.transpose %27, [0, 2, 1] : vector<3x4x16xf32> -> vector<3x16x4xf32>
    %c0_14 = arith.constant 0 : index
    %c0_15 = arith.constant 0 : index
    %c0_16 = arith.constant 0 : index
    %31 = vector.load %arg5[%c0_14, %c0_15, %c0_16] : memref<3x16x4xf32, #tpu.memory_space<vmem>>, vector<3x16x4xf32>
    tpu.vector_store %arg5[%c0_14, %c0_15, %c0_16], %30 {strides = array<i32>} : memref<3x16x4xf32, #tpu.memory_space<vmem>>, vector<3x16x4xf32>,
    return
  }
  func.func @transform_0(%arg0: i32) -> (i32, i32, i32) {
    %c0_i32 = arith.constant 0 : i32
    %c0_i32_0 = arith.constant 0 : i32
    %c0_i32_1 = arith.constant 0 : i32
    %c0_i32_2 = arith.constant 0 : i32
    return %c0_i32, %c0_i32_0, %c0_i32_1 : i32, i32, i32
  }
  func.func @transform_1(%arg0: i32) -> (i32, i32, i32) {
    %c0_i32 = arith.constant 0 : i32
    %c0_i32_0 = arith.constant 0 : i32
    %c0_i32_1 = arith.constant 0 : i32
    return %arg0, %c0_i32, %c0_i32_0 : i32, i32, i32
  }
  func.func @transform_2(%arg0: i32) -> (i32, i32, i32) {
    %c0_i32 = arith.constant 0 : i32
    %c0_i32_0 = arith.constant 0 : i32
    %c0_i32_1 = arith.constant 0 : i32
    return %arg0, %c0_i32, %c0_i32_0 : i32, i32, i32
  }
  func.func @transform_3(%arg0: i32) -> (i32, i32, i32) {
    %c0_i32 = arith.constant 0 : i32
    %c0_i32_0 = arith.constant 0 : i32
    %c0_i32_1 = arith.constant 0 : i32
    return %arg0, %c0_i32, %c0_i32_0 : i32, i32, i32
  }
  func.func @transform_4(%arg0: i32) -> (i32, i32, i32) {
    %c0_i32 = arith.constant 0 : i32
    %c0_i32_0 = arith.constant 0 : i32
    %c0_i32_1 = arith.constant 0 : i32
    return %arg0, %c0_i32, %c0_i32_0 : i32, i32, i32
  }
}

module attributes {stable_mosaic.version = 11 : i64} {
  func.func @_decoder_kernel(%arg0: i32, %arg1: memref<1x4x16xf32, #tpu.memory_space<vmem>>, %arg2: memref<3x4x1xf32, #tpu.memory_space<vmem>>, %arg3: memref<3x9x16xf32, #tpu.memory_space<vmem>>, %arg4: memref<3x9x16xf32, #tpu.memory_space<vmem>>, %arg5: memref<3x4x16xf32, #tpu.memory_space<vmem>>) attributes {dimension_semantics = [#tpu.dimension_semantics<parallel>], iteration_bounds = array<i64: 2>, scalar_prefetch = 0 : i64, scratch_operands = 0 : i64, tpu.core_type = #tpu.core_type<tc>, window_params = [{pipeline_mode = #tpu.pipeline_mode<synchronous>, transform_indices = @transform_0, window_bounds = array<i64: 1, 4, 16>}, {transform_indices = @transform_1, window_bounds = array<i64: 3, 4, 1>}, {transform_indices = @transform_2, window_bounds = array<i64: 3, 9, 16>}, {transform_indices = @transform_3, window_bounds = array<i64: 3, 9, 16>}, {transform_indices = @transform_4, window_bounds = array<i64: 3, 4, 16>}]} {
    %c0 = arith.constant 0 : index
    %c0_0 = arith.constant 0 : index
    %c0_1 = arith.constant 0 : index
    %0 = vector.load %arg3[%c0, %c0_0, %c0_1] : memref<3x9x16xf32, #tpu.memory_space<vmem>>, vector<3x9x16xf32>
    %cst = arith.constant 0.000000e+00 : f32
    %1 = vector.broadcast %cst : f32 to vector<3x9x16xf32>
    %2 = arith.subf %1, %0 : vector<3x9x16xf32>
    %3 = math.exp %2 : vector<3x9x16xf32>
    %cst_2 = arith.constant 1.000000e+00 : f32
    %4 = vector.broadcast %cst_2 : f32 to vector<3x9x16xf32>
    %5 = arith.addf %4, %3 : vector<3x9x16xf32>
    %cst_3 = arith.constant 1.000000e+00 : f32
    %6 = vector.broadcast %cst_3 : f32 to vector<3x9x16xf32>
    %7 = arith.divf %6, %5 : vector<3x9x16xf32>
    %8 = tpu.iota {dimensions = array<i32: 1>} : vector<3x9x16xi32>
    %c2_i32 = arith.constant 2 : i32
    %9 = vector.broadcast %c2_i32 : i32 to vector<3x9x16xi32>
    %10 = arith.cmpi sge, %8, %9 : vector<3x9x16xi32>
    %c4_i32 = arith.constant 4 : i32
    %11 = vector.broadcast %c4_i32 : i32 to vector<3x9x16xi32>
    %12 = arith.cmpi slt, %8, %11 : vector<3x9x16xi32>
    %13 = arith.andi %10, %12 : vector<3x9x16xi1>
    %14 = arith.select %13, %0, %7 : vector<3x9x16xi1>, vector<3x9x16xf32>
    %15 = vector.extract_strided_slice %8 {offsets = [0, 0, 0], sizes = [3, 4, 16], strides = [1, 1, 1]} : vector<3x9x16xi32> to vector<3x4x16xi32>
    %c2_i32_4 = arith.constant 2 : i32
    %16 = vector.broadcast %c2_i32_4 : i32 to vector<3x4x16xi32>
    %17 = arith.cmpi slt, %15, %16 : vector<3x4x16xi32>
    %18 = vector.extract_strided_slice %7 {offsets = [0, 0, 0], sizes = [3, 4, 16], strides = [1, 1, 1]} : vector<3x9x16xf32> to vector<3x4x16xf32>
    %c0_5 = arith.constant 0 : index
    %c0_6 = arith.constant 0 : index
    %c0_7 = arith.constant 0 : index
    %19 = vector.load %arg1[%c0_5, %c0_6, %c0_7] : memref<1x4x16xf32, #tpu.memory_space<vmem>>, vector<1x4x16xf32>
    %20 = vector.broadcast %19 : vector<1x4x16xf32> to vector<3x4x16xf32>
    %21 = arith.addf %18, %20 : vector<3x4x16xf32>
    %22 = vector.extract_strided_slice %0 {offsets = [0, 0, 0], sizes = [3, 4, 16], strides = [1, 1, 1]} : vector<3x9x16xf32> to vector<3x4x16xf32>
    %23 = math.exp %22 : vector<3x4x16xf32>
    %24 = arith.select %17, %21, %23 : vector<3x4x16xi1>, vector<3x4x16xf32>
    %c0_8 = arith.constant 0 : index
    %c0_9 = arith.constant 0 : index
    %c0_10 = arith.constant 0 : index
    %25 = vector.load %arg2[%c0_8, %c0_9, %c0_10] : memref<3x4x1xf32, #tpu.memory_space<vmem>>, vector<3x4x1xf32>
    %26 = vector.broadcast %25 : vector<3x4x1xf32> to vector<3x4x16xf32>
    %27 = arith.mulf %24, %26 : vector<3x4x16xf32>
    %c0_11 = arith.constant 0 : index
    %c0_12 = arith.constant 0 : index
    %c0_13 = arith.constant 0 : index
    %28 = vector.load %arg4[%c0_11, %c0_12, %c0_13] : memref<3x9x16xf32, #tpu.memory_space<vmem>>, vector<3x9x16xf32>
    tpu.vector_store %arg4[%c0_11, %c0_12, %c0_13], %14 {strides = array<i32>} : memref<3x9x16xf32, #tpu.memory_space<vmem>>, vector<3x9x16xf32>,
    %c0_14 = arith.constant 0 : index
    %c0_15 = arith.constant 0 : index
    %c0_16 = arith.constant 0 : index
    %29 = vector.load %arg5[%c0_14, %c0_15, %c0_16] : memref<3x4x16xf32, #tpu.memory_space<vmem>>, vector<3x4x16xf32>
    tpu.vector_store %arg5[%c0_14, %c0_15, %c0_16], %27 {strides = array<i32>} : memref<3x4x16xf32, #tpu.memory_space<vmem>>, vector<3x4x16xf32>,
    return
  }
  func.func @transform_0(%arg0: i32) -> (i32, i32, i32) {
    %c0_i32 = arith.constant 0 : i32
    %c0_i32_0 = arith.constant 0 : i32
    %c0_i32_1 = arith.constant 0 : i32
    %c0_i32_2 = arith.constant 0 : i32
    return %c0_i32, %c0_i32_0, %c0_i32_1 : i32, i32, i32
  }
  func.func @transform_1(%arg0: i32) -> (i32, i32, i32) {
    %c0_i32 = arith.constant 0 : i32
    %c0_i32_0 = arith.constant 0 : i32
    %c0_i32_1 = arith.constant 0 : i32
    return %arg0, %c0_i32, %c0_i32_0 : i32, i32, i32
  }
  func.func @transform_2(%arg0: i32) -> (i32, i32, i32) {
    %c0_i32 = arith.constant 0 : i32
    %c0_i32_0 = arith.constant 0 : i32
    %c0_i32_1 = arith.constant 0 : i32
    return %arg0, %c0_i32, %c0_i32_0 : i32, i32, i32
  }
  func.func @transform_3(%arg0: i32) -> (i32, i32, i32) {
    %c0_i32 = arith.constant 0 : i32
    %c0_i32_0 = arith.constant 0 : i32
    %c0_i32_1 = arith.constant 0 : i32
    return %arg0, %c0_i32, %c0_i32_0 : i32, i32, i32
  }
  func.func @transform_4(%arg0: i32) -> (i32, i32, i32) {
    %c0_i32 = arith.constant 0 : i32
    %c0_i32_0 = arith.constant 0 : i32
    %c0_i32_1 = arith.constant 0 : i32
    return %arg0, %c0_i32, %c0_i32_0 : i32, i32, i32
  }
}

</mosaic_0001>

<llo_original>
// kernel: tpu_custom_call.1
$region0: #{tpu_custom_call.1}
  #allocation0 [shape = 'u32[]', space=smem, size = 0x4, offset = 0x4, fixed_abs, tag = 'smem constant byte address 0x4 - core index']
  #allocation1 [shape = 'u32[144,128]{1,0:T(1,128)}', space=vmem, size = 0x12000, scoped, tag = 'internal scratch']
  %s0 = inlined_call_operand.vmem [shape: f32[1,4,16], index: 0, kind: input, shape index: {}]
  %s1 = inlined_call_operand.vmem [shape: f32[6,4,1], index: 1, kind: input, shape index: {}]
  %s2 = inlined_call_operand.vmem [shape: f32[6,9,16], index: 2, kind: input, shape index: {}]
  %s3 = inlined_call_operand.vmem [shape: f32[6,16,9], index: 3, kind: output, shape index: {0}]
  %s4 = inlined_call_operand.vmem [shape: f32[6,16,4], index: 4, kind: output, shape index: {1}]
  %5 = xla_tuple %s3, %s4
  %s6 = sld [smem:[#allocation0]]
  $region53: #{tpu_custom_call.1} parent=0
    _
  %s8 = ssub.s32 1, %s6
  %s9 = scalar_select 0, %s8, %s6
  loop: start=0, step=1, limit=4
  $region2: #{tpu_custom_call.1} parent=0 // loop_pre_header
    _
  $region3: #{tpu_custom_call.1} parent=0 // loop_header
    %s11 = sphi 0, %s15
    %p12 = scmp.ge.s32.totalorder %s11, 4
    %s19 = sphi 0, %s19
    %s21 = sphi 0, %s19
    %s22 = sphi 0, %s21
    %s36 = sphi 0, %s22
    %s42 = sphi 0, %s44
    %s45 = sphi 0, %s42
    %s46 = sphi 0, %s45
    %s62 = sphi 0, %s46
    %s68 = sphi 0, %s70
    %s71 = sphi 0, %s68
    %s72 = sphi 0, %s71
    %s88 = sphi 0, %s72
    %s94 = sphi 0, %s96
    %s97 = sphi 0, %s94
    %s98 = sphi 0, %s97
    %s114 = sphi 0, %s98
    %s120 = sphi 0, %s122
    %s123 = sphi 0, %s120
    %s124 = sphi 0, %s123
    %s140 = sphi 0, %s124
  $region4: #{tpu_custom_call.1} parent=0 // loop_header_branch
    %14 = sbr.rel (%p12) target = $region8
  $region5: #{tpu_custom_call.1} parent=0 // loop_body
    %s16 = ssub.s32 %s11, 1
    %s17 = ssub.s32 %s11, 2
    %s18 = sadd.s32 %s11, 1
    %s20 = sadd.s32 %s19, 1
    %p23 = scmp.eq.s32.totalorder %s11, 1
    %p24 = scmp.ne.s32.totalorder %s19, %s21
    %p25 = scmp.eq.s32.totalorder %s11, 0
    %p26 = por %p24, %p25
    %p27 = scmp.ne.s32.totalorder %s19, %s21
    %p28 = scmp.eq.s32.totalorder %s16, 1
    %p29 = por %p27, %p28
    %p30 = scmp.ne.s32.totalorder %s21, %s22
    %p31 = scmp.eq.s32.totalorder %s16, 0
    %p32 = por %p30, %p31
    %p33 = scmp.ne.s32.totalorder %s21, %s22
    %p34 = scmp.eq.s32.totalorder %s17, 1
    %p35 = por %p33, %p34
    %p37 = scmp.ne.s32.totalorder %s22, %s36
    %p38 = scmp.eq.s32.totalorder %s17, 0
    %p39 = por %p37, %p38
    %s40 = ssub.s32 %s11, %s18
    %p41 = scmp.eq.s32.totalorder %s40, 0
    %s43 = sadd.s32 %s42, 1
    %s44 = scalar_select %p41, %s42, %s43
    %p47 = pneg %p41
    %p48 = scmp.eq.s32.totalorder %s11, 1
    %p49 = por %p47, %p48
    %p50 = scmp.ne.s32.totalorder %s42, %s45
    %p51 = scmp.eq.s32.totalorder %s11, 0
    %p52 = por %p50, %p51
    %p53 = scmp.ne.s32.totalorder %s42, %s45
    %p54 = scmp.eq.s32.totalorder %s16, 1
    %p55 = por %p53, %p54
    %p56 = scmp.ne.s32.totalorder %s45, %s46
    %p57 = scmp.eq.s32.totalorder %s16, 0
    %p58 = por %p56, %p57
    %p59 = scmp.ne.s32.totalorder %s45, %s46
    %p60 = scmp.eq.s32.totalorder %s17, 1
    %p61 = por %p59, %p60
    %p63 = scmp.ne.s32.totalorder %s46, %s62
    %p64 = scmp.eq.s32.totalorder %s17, 0
    %p65 = por %p63, %p64
    %s66 = ssub.s32 %s11, %s18
    %p67 = scmp.eq.s32.totalorder %s66, 0
    %s69 = sadd.s32 %s68, 1
    %s70 = scalar_select %p67, %s68, %s69
    %p73 = pneg %p67
    %p74 = scmp.eq.s32.totalorder %s11, 1
    %p75 = por %p73, %p74
    %p76 = scmp.ne.s32.totalorder %s68, %s71
    %p77 = scmp.eq.s32.totalorder %s11, 0
    %p78 = por %p76, %p77
    %p79 = scmp.ne.s32.totalorder %s68, %s71
    %p80 = scmp.eq.s32.totalorder %s16, 1
    %p81 = por %p79, %p80
    %p82 = scmp.ne.s32.totalorder %s71, %s72
    %p83 = scmp.eq.s32.totalorder %s16, 0
    %p84 = por %p82, %p83
    %p85 = scmp.ne.s32.totalorder %s71, %s72
    %p86 = scmp.eq.s32.totalorder %s17, 1
    %p87 = por %p85, %p86
    %p89 = scmp.ne.s32.totalorder %s72, %s88
    %p90 = scmp.eq.s32.totalorder %s17, 0
    %p91 = por %p89, %p90
    %s92 = ssub.s32 %s11, %s18
    %p93 = scmp.eq.s32.totalorder %s92, 0
    %s95 = sadd.s32 %s94, 1
    %s96 = scalar_select %p93, %s94, %s95
    %p99 = pneg %p93
    %p100 = scmp.eq.s32.totalorder %s11, 1
    %p101 = por %p99, %p100
    %p102 = scmp.ne.s32.totalorder %s94, %s97
    %p103 = scmp.eq.s32.totalorder %s11, 0
    %p104 = por %p102, %p103
    %p105 = scmp.ne.s32.totalorder %s94, %s97
    %p106 = scmp.eq.s32.totalorder %s16, 1
    %p107 = por %p105, %p106
    %p108 = scmp.ne.s32.totalorder %s97, %s98
    %p109 = scmp.eq.s32.totalorder %s16, 0
    %p110 = por %p108, %p109
    %p111 = scmp.ne.s32.totalorder %s97, %s98
    %p112 = scmp.eq.s32.totalorder %s17, 1
    %p113 = por %p111, %p112
    %p115 = scmp.ne.s32.totalorder %s98, %s114
    %p116 = scmp.eq.s32.totalorder %s17, 0
    %p117 = por %p115, %p116
    %s118 = ssub.s32 %s11, %s18
    %p119 = scmp.eq.s32.totalorder %s118, 0
    %s121 = sadd.s32 %s120, 1
    %s122 = scalar_select %p119, %s120, %s121
    %p125 = pneg %p119
    %p126 = scmp.eq.s32.totalorder %s11, 1
    %p127 = por %p125, %p126
    %p128 = scmp.ne.s32.totalorder %s120, %s123
    %p129 = scmp.eq.s32.totalorder %s11, 0
    %p130 = por %p128, %p129
    %p131 = scmp.ne.s32.totalorder %s120, %s123
    %p132 = scmp.eq.s32.totalorder %s16, 1
    %p133 = por %p131, %p132
    %p134 = scmp.ne.s32.totalorder %s123, %s124
    %p135 = scmp.eq.s32.totalorder %s16, 0
    %p136 = por %p134, %p135
    %p137 = scmp.ne.s32.totalorder %s123, %s124
    %p138 = scmp.eq.s32.totalorder %s17, 1
    %p139 = por %p137, %p138
    %p141 = scmp.ne.s32.totalorder %s124, %s140
    %p142 = scmp.eq.s32.totalorder %s17, 0
    %p143 = por %p141, %p142
    %p144 = scmp.le.s32.totalorder 1, %s11
    %p145 = scmp.lt.s32.totalorder %s11, 3
    %p146 = pnand %p144, %p145
    %p147 = pneg %p146
    // Predicated region
    $region9: #{tpu_custom_call.1} parent=5 // pred_check
      _
    $region10: #{tpu_custom_call.1} parent=5 // pred_check_branch
      %149 = sbr.rel (%p146) target = $region12
    $region11: #{tpu_custom_call.1} parent=5 // pred_region
      %s150 = ssub.s32 %s11, 1
      // Predicated region
      $region13: #{tpu_custom_call.1} parent=11 // pred_check
        %p151 = pneg %p32
      $region14: #{tpu_custom_call.1} parent=11 // pred_check_branch
        %153 = sbr.rel (%p151) target = $region16
      $region15: #{tpu_custom_call.1} parent=11 // pred_region
        _
      $region16: #{tpu_custom_call.1} parent=11 // pred_fallthru
        _
    $region12: #{tpu_custom_call.1} parent=5 // pred_fallthru
      _
    %p154 = scmp.lt.s32.totalorder %s11, 2
    // Predicated region
    $region17: #{tpu_custom_call.1} parent=5 // pred_check
      %p155 = pneg %p154
    $region18: #{tpu_custom_call.1} parent=5 // pred_check_branch
      %157 = sbr.rel (%p155) target = $region20
    $region19: #{tpu_custom_call.1} parent=5 // pred_region
      // Predicated region
      $region21: #{tpu_custom_call.1} parent=19 // pred_check
        %p158 = pneg %p52
      $region22: #{tpu_custom_call.1} parent=19 // pred_check_branch
        %160 = sbr.rel (%p158) target = $region24
      $region23: #{tpu_custom_call.1} parent=19 // pred_region
        %s161 = smul.u32 3, %s11
        %p162 = scmp.lt.s32.totalorder %s161, 5
        %s163 = scalar_select %p162, %s161, 5
        %s164 = smul.addr %s163, 4
        %s165 = scalar_lea.vmem %s1, %s164
        %s166 = smul.u32 3, %s11
      $region24: #{tpu_custom_call.1} parent=19 // pred_fallthru
        _
      // Predicated region
      $region25: #{tpu_custom_call.1} parent=19 // pred_check
        %p167 = pneg %p78
      $region26: #{tpu_custom_call.1} parent=19 // pred_check_branch
        %169 = sbr.rel (%p167) target = $region28
      $region27: #{tpu_custom_call.1} parent=19 // pred_region
        %s170 = smul.u32 3, %s11
        %p171 = scmp.lt.s32.totalorder %s170, 5
        %s172 = scalar_select %p171, %s170, 5
        %s173 = smul.addr %s172, 2
        %s174 = smul.addr %s173, 8
        %s175 = scalar_lea.vmem %s2, %s174
        %s176 = smul.u32 3, %s11
      $region28: #{tpu_custom_call.1} parent=19 // pred_fallthru
        _
    $region20: #{tpu_custom_call.1} parent=5 // pred_fallthru
      _
    %p177 = scmp.le.s32.totalorder 1, %s11
    %p178 = scmp.lt.s32.totalorder %s11, 3
    %p179 = pnand %p177, %p178
    %p180 = pneg %p179
    // Predicated region
    $region29: #{tpu_custom_call.1} parent=5 // pred_check
      _
    $region30: #{tpu_custom_call.1} parent=5 // pred_check_branch
      %182 = sbr.rel (%p179) target = $region32
    $region31: #{tpu_custom_call.1} parent=5 // pred_region
      %s183 = ssub.s32 %s11, 1
      %p184 = pneg %p32
      %p185 = pneg %p29
      %s186 = smul.u32 3, %s16
      %p187 = scmp.lt.s32.totalorder %s186, 5
      %s188 = scalar_select %p187, %s186, 5
      %s189 = smul.addr %s188, 4
      %s190 = scalar_lea.vmem %s1, %s189
      %p191 = pneg %p58
      %p192 = pneg %p55
      %s193 = smul.u32 3, %s16
      %p194 = scmp.lt.s32.totalorder %s193, 5
      %s195 = scalar_select %p194, %s193, 5
      %s196 = smul.addr %s195, 2
      %s197 = smul.addr %s196, 8
      %s198 = scalar_lea.vmem %s2, %s197
      %p199 = pneg %p84
      %p200 = pneg %p81
      %p201 = pneg %p110
      %p202 = pneg %p107
      %s203 = smul.u32 3, %s16
      %p204 = scmp.lt.s32.totalorder %s203, 5
      %s205 = scalar_select %p204, %s203, 5
      %s206 = smul.addr %s205, 2
      %s207 = smul.addr %s206, 8
      %s208 = scalar_lea.vmem %s3, %s207
      %p209 = pneg %p136
      %p210 = pneg %p133
      %s211 = smul.u32 3, %s16
      %p212 = scmp.lt.s32.totalorder %s211, 5
      %s213 = scalar_select %p212, %s211, 5
      %s214 = smul.addr %s213, 2
      %s215 = smul.addr %s214, 8
      %s216 = scalar_lea.vmem %s4, %s215
      %s217 = smul.u32 3, %s16
      %p218 = scmp.lt.s32.totalorder %s217, 5
      %s219 = scalar_select %p218, %s217, 5
      %s220 = smul.addr %s219, 4
      %s221 = scalar_lea.vmem %s1, %s220
      %s222 = smul.u32 3, %s16
      %s223 = smul.u32 3, %s16
      %p224 = scmp.lt.s32.totalorder %s223, 5
      %s225 = scalar_select %p224, %s223, 5
      %s226 = smul.addr %s225, 2
      %s227 = smul.addr %s226, 8
      %s228 = scalar_lea.vmem %s2, %s227
      %s229 = smul.u32 3, %s16
      %s230 = smul.u32 3, %s16
      %p231 = scmp.lt.s32.totalorder %s230, 5
      %s232 = scalar_select %p231, %s230, 5
      %s233 = smul.addr %s232, 2
      %s234 = smul.addr %s233, 8
      %s235 = scalar_lea.vmem %s3, %s234
      %s236 = smul.u32 3, %s16
      %s237 = smul.u32 3, %s16
      %p238 = scmp.lt.s32.totalorder %s237, 5
      %s239 = scalar_select %p238, %s237, 5
      %s240 = smul.addr %s239, 2
      %s241 = smul.addr %s240, 8
      %s242 = scalar_lea.vmem %s4, %s241
      %s243 = smul.u32 3, %s16
      %v244 = vld [vmem:[%s228] sm:$0xff]
      %v245 = vld [vmem:[%s228 + $0x8] sm:$0x1]
      %v246 = vld [vmem:[%s228 + $0x10] sm:$0xff]
      %v247 = vld [vmem:[%s228 + $0x18] sm:$0x1]
      %v248 = vld [vmem:[%s228 + $0x20] sm:$0xff]
      %v249 = vld [vmem:[%s228 + $0x28] sm:$0x1]
      %v250 = vsub.f32 0.0, %v244
      %v251 = vsub.f32 0.0, %v245
      %v252 = vsub.f32 0.0, %v246
      %v253 = vsub.f32 0.0, %v247
      %v254 = vsub.f32 0.0, %v248
      %v255 = vsub.f32 0.0, %v249
      %v256 = vmul.f32 %v250, 1.442695
      %v257 = vpow.pop %v256
      %v258 = vmul.f32 %v251, 1.442695
      %v259 = vpow.pop %v258
      %v260 = vmul.f32 %v252, 1.442695
      %v261 = vpow.pop %v260
      %v262 = vmul.f32 %v253, 1.442695
      %v263 = vpow.pop %v262
      %v264 = vmul.f32 %v254, 1.442695
      %v265 = vpow.pop %v264
      %v266 = vmul.f32 %v255, 1.442695
      %v267 = vpow.pop %v266
      %v268 = vadd.f32 %v257, 1.0
      %v269 = vadd.f32 %v259, 1.0
      %v270 = vadd.f32 %v261, 1.0
      %v271 = vadd.f32 %v263, 1.0
      %v272 = vadd.f32 %v265, 1.0
      %v273 = vadd.f32 %v267, 1.0
      %v274 = vrcp.pop %v268
      %v275 = vmul.f32 1.0, %v274
      %v276 = vrcp.pop %v269
      %v277 = vmul.f32 1.0, %v276
      %v278 = vrcp.pop %v270
      %v279 = vmul.f32 1.0, %v278
      %v280 = vrcp.pop %v271
      %v281 = vmul.f32 1.0, %v280
      %v282 = vrcp.pop %v272
      %v283 = vmul.f32 1.0, %v282
      %v284 = vrcp.pop %v273
      %v285 = vmul.f32 1.0, %v284
      %v286 = vlaneseq
      %v287 = vshrl.u32 %v286, 7
      %v288 = vadd.s32 %v287, 8
      %vm289 = vcmp.ge.s32.totalorder %v287, 2
      %vm290 = vcmp.ge.s32.totalorder %v288, 2
      %vm291 = vcmp.lt.s32.totalorder %v287, 4
      %vm292 = vcmp.lt.s32.totalorder %v288, 4
      %vm293 = vmand %vm289, %vm291
      %vm294 = vmand %vm290, %vm292
      %v295 = vsel %vm293, %v244, %v275
      %v296 = vsel %vm294, %v245, %v277
      %v297 = vsel %vm293, %v246, %v279
      %v298 = vsel %vm294, %v247, %v281
      %v299 = vsel %vm293, %v248, %v283
      %v300 = vsel %vm294, %v249, %v285
      %vm301 = vcmp.lt.s32.totalorder %v287, 2
      %v302 = vld [vmem:[%s0] sm:$0xf]
      %v303 = vadd.f32 %v275, %v302
      %v304 = vadd.f32 %v279, %v302
      %v305 = vadd.f32 %v283, %v302
      %v306 = vmul.f32 %v244, 1.442695
      %v307 = vpow.pop %v306
      %v308 = vmul.f32 %v246, 1.442695
      %v309 = vpow.pop %v308
      %v310 = vmul.f32 %v248, 1.442695
      %v311 = vpow.pop %v310
      %v312 = vsel %vm301, %v303, %v307
      %v313 = vsel %vm301, %v304, %v309
      %v314 = vsel %vm301, %v305, %v311
      %v315 = vld [vmem:[%s221] sm:$0xf]
      %v316 = vld [vmem:[%s221 + $0x4] sm:$0xf]
      %v317 = vld [vmem:[%s221 + $0x8] sm:$0xf]
      %319 = vset.pattern.permute.xlu0 0
      %320 = vperm.xlu0 %319, %v315
      %v321 = vpop.permute.xlu0 %320
      %324 = vset.pattern.permute.xlu0 0
      %325 = vperm.xlu0 %324, %v316
      %v326 = vpop.permute.xlu0 %325
      %329 = vset.pattern.permute.xlu0 0
      %330 = vperm.xlu0 %329, %v317
      %v331 = vpop.permute.xlu0 %330
      %v333 = vmul.f32 %v312, %v321
      %v334 = vmul.f32 %v313, %v326
      %v335 = vmul.f32 %v314, %v331
      %336 = vxpose.xlu0.b32.start [1/16] %v295, 128
      %337 = vxpose.xlu0.b32.cont [2/16] %v296, 128
      %338 = vxpose.xlu0.b32.cont [3/16] 0.0, 128
      %339 = vxpose.xlu0.b32.cont [4/16] 0.0, 128
      %340 = vxpose.xlu0.b32.cont [5/16] 0.0, 128
      %341 = vxpose.xlu0.b32.cont [6/16] 0.0, 128
      %342 = vxpose.xlu0.b32.cont [7/16] 0.0, 128
      %343 = vxpose.xlu0.b32.cont [8/16] 0.0, 128
      %344 = vxpose.xlu0.b32.cont [9/16] 0.0, 128
      %345 = vxpose.xlu0.b32.cont [10/16] 0.0, 128
      %346 = vxpose.xlu0.b32.cont [11/16] 0.0, 128
      %347 = vxpose.xlu0.b32.cont [12/16] 0.0, 128
      %348 = vxpose.xlu0.b32.cont [13/16] 0.0, 128
      %349 = vxpose.xlu0.b32.cont [14/16] 0.0, 128
      %350 = vxpose.xlu0.b32.cont [15/16] 0.0, 128
      %351 = vxpose.xlu0.b32.end [16/16] 0.0, 128
      %v352 = vpop.trf.xlu0
      %v353 = vpop.trf.xlu0
      %v354 = vpop.trf.xlu0
      %v355 = vpop.trf.xlu0
      %v356 = vpop.trf.xlu0
      %v357 = vpop.trf.xlu0
      %v358 = vpop.trf.xlu0
      %v359 = vpop.trf.xlu0
      %v360 = vpop.trf.xlu0
      %v361 = vpop.trf.xlu0
      %v362 = vpop.trf.xlu0
      %v363 = vpop.trf.xlu0
      %v364 = vpop.trf.xlu0
      %v365 = vpop.trf.xlu0
      %v366 = vpop.trf.xlu0
      %v367 = vpop.trf.xlu0
      %368 = vxpose.xlu0.b32.start [1/16] %v297, 128
      %369 = vxpose.xlu0.b32.cont [2/16] %v298, 128
      %370 = vxpose.xlu0.b32.cont [3/16] 0.0, 128
      %371 = vxpose.xlu0.b32.cont [4/16] 0.0, 128
      %372 = vxpose.xlu0.b32.cont [5/16] 0.0, 128
      %373 = vxpose.xlu0.b32.cont [6/16] 0.0, 128
      %374 = vxpose.xlu0.b32.cont [7/16] 0.0, 128
      %375 = vxpose.xlu0.b32.cont [8/16] 0.0, 128
      %376 = vxpose.xlu0.b32.cont [9/16] 0.0, 128
      %377 = vxpose.xlu0.b32.cont [10/16] 0.0, 128
      %378 = vxpose.xlu0.b32.cont [11/16] 0.0, 128
      %379 = vxpose.xlu0.b32.cont [12/16] 0.0, 128
      %380 = vxpose.xlu0.b32.cont [13/16] 0.0, 128
      %381 = vxpose.xlu0.b32.cont [14/16] 0.0, 128
      %382 = vxpose.xlu0.b32.cont [15/16] 0.0, 128
      %383 = vxpose.xlu0.b32.end [16/16] 0.0, 128
      %v384 = vpop.trf.xlu0
      %v385 = vpop.trf.xlu0
      %v386 = vpop.trf.xlu0
      %v387 = vpop.trf.xlu0
      %v388 = vpop.trf.xlu0
      %v389 = vpop.trf.xlu0
      %v390 = vpop.trf.xlu0
      %v391 = vpop.trf.xlu0
      %v392 = vpop.trf.xlu0
      %v393 = vpop.trf.xlu0
      %v394 = vpop.trf.xlu0
      %v395 = vpop.trf.xlu0
      %v396 = vpop.trf.xlu0
      %v397 = vpop.trf.xlu0
      %v398 = vpop.trf.xlu0
      %v399 = vpop.trf.xlu0
      %400 = vxpose.xlu0.b32.start [1/16] %v299, 128
      %401 = vxpose.xlu0.b32.cont [2/16] %v300, 128
      %402 = vxpose.xlu0.b32.cont [3/16] 0.0, 128
      %403 = vxpose.xlu0.b32.cont [4/16] 0.0, 128
      %404 = vxpose.xlu0.b32.cont [5/16] 0.0, 128
      %405 = vxpose.xlu0.b32.cont [6/16] 0.0, 128
      %406 = vxpose.xlu0.b32.cont [7/16] 0.0, 128
      %407 = vxpose.xlu0.b32.cont [8/16] 0.0, 128
      %408 = vxpose.xlu0.b32.cont [9/16] 0.0, 128
      %409 = vxpose.xlu0.b32.cont [10/16] 0.0, 128
      %410 = vxpose.xlu0.b32.cont [11/16] 0.0, 128
      %411 = vxpose.xlu0.b32.cont [12/16] 0.0, 128
      %412 = vxpose.xlu0.b32.cont [13/16] 0.0, 128
      %413 = vxpose.xlu0.b32.cont [14/16] 0.0, 128
      %414 = vxpose.xlu0.b32.cont [15/16] 0.0, 128
      %415 = vxpose.xlu0.b32.end [16/16] 0.0, 128
      %v416 = vpop.trf.xlu0
      %v417 = vpop.trf.xlu0
      %v418 = vpop.trf.xlu0
      %v419 = vpop.trf.xlu0
      %v420 = vpop.trf.xlu0
      %v421 = vpop.trf.xlu0
      %v422 = vpop.trf.xlu0
      %v423 = vpop.trf.xlu0
      %v424 = vpop.trf.xlu0
      %v425 = vpop.trf.xlu0
      %v426 = vpop.trf.xlu0
      %v427 = vpop.trf.xlu0
      %v428 = vpop.trf.xlu0
      %v429 = vpop.trf.xlu0
      %v430 = vpop.trf.xlu0
      %v431 = vpop.trf.xlu0
      %vm432 = vcmask 72704
      %433 = vst.msk [vmem:[%s235] sm:$0xff] %vm432, %v352
      %434 = vst.msk [vmem:[%s235 + $0x8] sm:$0xff] %vm432, %v353
      %435 = vst.msk [vmem:[%s235 + $0x10] sm:$0xff] %vm432, %v384
      %436 = vst.msk [vmem:[%s235 + $0x18] sm:$0xff] %vm432, %v385
      %437 = vst.msk [vmem:[%s235 + $0x20] sm:$0xff] %vm432, %v416
      %438 = vst.msk [vmem:[%s235 + $0x28] sm:$0xff] %vm432, %v417
      %439 = vxpose.xlu0.b32.start [1/16] %v333, 128
      %440 = vxpose.xlu0.b32.cont [2/16] 0.0, 128
      %441 = vxpose.xlu0.b32.cont [3/16] 0.0, 128
      %442 = vxpose.xlu0.b32.cont [4/16] 0.0, 128
      %443 = vxpose.xlu0.b32.cont [5/16] 0.0, 128
      %444 = vxpose.xlu0.b32.cont [6/16] 0.0, 128
      %445 = vxpose.xlu0.b32.cont [7/16] 0.0, 128
      %446 = vxpose.xlu0.b32.cont [8/16] 0.0, 128
      %447 = vxpose.xlu0.b32.cont [9/16] 0.0, 128
      %448 = vxpose.xlu0.b32.cont [10/16] 0.0, 128
      %449 = vxpose.xlu0.b32.cont [11/16] 0.0, 128
      %450 = vxpose.xlu0.b32.cont [12/16] 0.0, 128
      %451 = vxpose.xlu0.b32.cont [13/16] 0.0, 128
      %452 = vxpose.xlu0.b32.cont [14/16] 0.0, 128
      %453 = vxpose.xlu0.b32.cont [15/16] 0.0, 128
      %454 = vxpose.xlu0.b32.end [16/16] 0.0, 128
      %v455 = vpop.trf.xlu0
      %v456 = vpop.trf.xlu0
      %v457 = vpop.trf.xlu0
      %v458 = vpop.trf.xlu0
      %v459 = vpop.trf.xlu0
      %v460 = vpop.trf.xlu0
      %v461 = vpop.trf.xlu0
      %v462 = vpop.trf.xlu0
      %v463 = vpop.trf.xlu0
      %v464 = vpop.trf.xlu0
      %v465 = vpop.trf.xlu0
      %v466 = vpop.trf.xlu0
      %v467 = vpop.trf.xlu0
      %v468 = vpop.trf.xlu0
      %v469 = vpop.trf.xlu0
      %v470 = vpop.trf.xlu0
      %471 = vxpose.xlu0.b32.start [1/16] %v334, 128
      %472 = vxpose.xlu0.b32.cont [2/16] 0.0, 128
      %473 = vxpose.xlu0.b32.cont [3/16] 0.0, 128
      %474 = vxpose.xlu0.b32.cont [4/16] 0.0, 128
      %475 = vxpose.xlu0.b32.cont [5/16] 0.0, 128
      %476 = vxpose.xlu0.b32.cont [6/16] 0.0, 128
      %477 = vxpose.xlu0.b32.cont [7/16] 0.0, 128
      %478 = vxpose.xlu0.b32.cont [8/16] 0.0, 128
      %479 = vxpose.xlu0.b32.cont [9/16] 0.0, 128
      %480 = vxpose.xlu0.b32.cont [10/16] 0.0, 128
      %481 = vxpose.xlu0.b32.cont [11/16] 0.0, 128
      %482 = vxpose.xlu0.b32.cont [12/16] 0.0, 128
      %483 = vxpose.xlu0.b32.cont [13/16] 0.0, 128
      %484 = vxpose.xlu0.b32.cont [14/16] 0.0, 128
      %485 = vxpose.xlu0.b32.cont [15/16] 0.0, 128
      %486 = vxpose.xlu0.b32.end [16/16] 0.0, 128
      %v487 = vpop.trf.xlu0
      %v488 = vpop.trf.xlu0
      %v489 = vpop.trf.xlu0
      %v490 = vpop.trf.xlu0
      %v491 = vpop.trf.xlu0
      %v492 = vpop.trf.xlu0
      %v493 = vpop.trf.xlu0
      %v494 = vpop.trf.xlu0
      %v495 = vpop.trf.xlu0
      %v496 = vpop.trf.xlu0
      %v497 = vpop.trf.xlu0
      %v498 = vpop.trf.xlu0
      %v499 = vpop.trf.xlu0
      %v500 = vpop.trf.xlu0
      %v501 = vpop.trf.xlu0
      %v502 = vpop.trf.xlu0
      %503 = vxpose.xlu0.b32.start [1/16] %v335, 128
      %504 = vxpose.xlu0.b32.cont [2/16] 0.0, 128
      %505 = vxpose.xlu0.b32.cont [3/16] 0.0, 128
      %506 = vxpose.xlu0.b32.cont [4/16] 0.0, 128
      %507 = vxpose.xlu0.b32.cont [5/16] 0.0, 128
      %508 = vxpose.xlu0.b32.cont [6/16] 0.0, 128
      %509 = vxpose.xlu0.b32.cont [7/16] 0.0, 128
      %510 = vxpose.xlu0.b32.cont [8/16] 0.0, 128
      %511 = vxpose.xlu0.b32.cont [9/16] 0.0, 128
      %512 = vxpose.xlu0.b32.cont [10/16] 0.0, 128
      %513 = vxpose.xlu0.b32.cont [11/16] 0.0, 128
      %514 = vxpose.xlu0.b32.cont [12/16] 0.0, 128
      %515 = vxpose.xlu0.b32.cont [13/16] 0.0, 128
      %516 = vxpose.xlu0.b32.cont [14/16] 0.0, 128
      %517 = vxpose.xlu0.b32.cont [15/16] 0.0, 128
      %518 = vxpose.xlu0.b32.end [16/16] 0.0, 128
      %v519 = vpop.trf.xlu0
      %v520 = vpop.trf.xlu0
      %v521 = vpop.trf.xlu0
      %v522 = vpop.trf.xlu0
      %v523 = vpop.trf.xlu0
      %v524 = vpop.trf.xlu0
      %v525 = vpop.trf.xlu0
      %v526 = vpop.trf.xlu0
      %v527 = vpop.trf.xlu0
      %v528 = vpop.trf.xlu0
      %v529 = vpop.trf.xlu0
      %v530 = vpop.trf.xlu0
      %v531 = vpop.trf.xlu0
      %v532 = vpop.trf.xlu0
      %v533 = vpop.trf.xlu0
      %v534 = vpop.trf.xlu0
      %vm535 = vcmask 31744
      %536 = vst.msk [vmem:[%s242] sm:$0xff] %vm535, %v455
      %537 = vst.msk [vmem:[%s242 + $0x8] sm:$0xff] %vm535, %v456
      %538 = vst.msk [vmem:[%s242 + $0x10] sm:$0xff] %vm535, %v487
      %539 = vst.msk [vmem:[%s242 + $0x18] sm:$0xff] %vm535, %v488
      %540 = vst.msk [vmem:[%s242 + $0x20] sm:$0xff] %vm535, %v519
      %541 = vst.msk [vmem:[%s242 + $0x28] sm:$0xff] %vm535, %v520
      %s542 = smul.u32 3, %s16
      %p543 = scmp.lt.s32.totalorder %s542, 5
      %s544 = scalar_select %p543, %s542, 5
      %s545 = smul.addr %s544, 2
      %s546 = smul.addr %s545, 8
      %s547 = scalar_lea.vmem %s3, %s546
      %s548 = smul.u32 3, %s16
      %p549 = scmp.lt.s32.totalorder %s548, 5
      %s550 = scalar_select %p549, %s548, 5
      %s551 = smul.addr %s550, 2
      %s552 = smul.addr %s551, 8
      %s553 = scalar_lea.vmem %s4, %s552
      // Predicated region
      $region33: #{tpu_custom_call.1} parent=31 // pred_check
        %p554 = pneg %p107
      $region34: #{tpu_custom_call.1} parent=31 // pred_check_branch
        %556 = sbr.rel (%p554) target = $region36
      $region35: #{tpu_custom_call.1} parent=31 // pred_region
        %s557 = smul.u32 3, %s16
      $region36: #{tpu_custom_call.1} parent=31 // pred_fallthru
        _
      // Predicated region
      $region37: #{tpu_custom_call.1} parent=31 // pred_check
        %p558 = pneg %p133
      $region38: #{tpu_custom_call.1} parent=31 // pred_check_branch
        %560 = sbr.rel (%p558) target = $region40
      $region39: #{tpu_custom_call.1} parent=31 // pred_region
        %s561 = smul.u32 3, %s16
      $region40: #{tpu_custom_call.1} parent=31 // pred_fallthru
        _
    $region32: #{tpu_custom_call.1} parent=5 // pred_fallthru
      _
    %p562 = scmp.le.s32.totalorder 2, %s11
    // Predicated region
    $region41: #{tpu_custom_call.1} parent=5 // pred_check
      %p563 = pneg %p562
    $region42: #{tpu_custom_call.1} parent=5 // pred_check_branch
      %565 = sbr.rel (%p563) target = $region44
    $region43: #{tpu_custom_call.1} parent=5 // pred_region
      %s566 = ssub.s32 %s11, 2
      // Predicated region
      $region45: #{tpu_custom_call.1} parent=43 // pred_check
        %p567 = pneg %p113
      $region46: #{tpu_custom_call.1} parent=43 // pred_check_branch
        %569 = sbr.rel (%p567) target = $region48
      $region47: #{tpu_custom_call.1} parent=43 // pred_region
        %s570 = smul.u32 3, %s17
        %p571 = scmp.lt.s32.totalorder %s570, 5
        %s572 = scalar_select %p571, %s570, 5
        %s573 = smul.addr %s572, 2
        %s574 = smul.addr %s573, 8
        %s575 = scalar_lea.vmem %s3, %s574
      $region48: #{tpu_custom_call.1} parent=43 // pred_fallthru
        _
      // Predicated region
      $region49: #{tpu_custom_call.1} parent=43 // pred_check
        %p576 = pneg %p139
      $region50: #{tpu_custom_call.1} parent=43 // pred_check_branch
        %578 = sbr.rel (%p576) target = $region52
      $region51: #{tpu_custom_call.1} parent=43 // pred_region
        %s579 = smul.u32 3, %s17
        %p580 = scmp.lt.s32.totalorder %s579, 5
        %s581 = scalar_select %p580, %s579, 5
        %s582 = smul.addr %s581, 2
        %s583 = smul.addr %s582, 8
        %s584 = scalar_lea.vmem %s4, %s583
      $region52: #{tpu_custom_call.1} parent=43 // pred_fallthru
        _
    $region44: #{tpu_custom_call.1} parent=5 // pred_fallthru
      _
  $region6: #{tpu_custom_call.1} parent=0 // loop_footer
    %s15 = sadd.s32 1, %s11
  $region7: #{tpu_custom_call.1} parent=0 // loop_footer_branch
    %10 = sbr.rel target = $region3
  $region8: #{tpu_custom_call.1} parent=0 // loop_exit
    _

// kernel: tpu_custom_call.1
$region0: #{tpu_custom_call.1}
  #allocation0 [shape = 'u32[]', space=smem, size = 0x4, offset = 0x4, fixed_abs, tag = 'smem constant byte address 0x4 - core index']
  #allocation1 [shape = 'u32[144,128]{1,0:T(1,128)}', space=vmem, size = 0x12000, scoped, tag = 'internal scratch']
  %s0 = inlined_call_operand.vmem [shape: f32[1,4,16], index: 0, kind: input, shape index: {}]
  %s1 = inlined_call_operand.vmem [shape: f32[6,4,1], index: 1, kind: input, shape index: {}]
  %s2 = inlined_call_operand.vmem [shape: f32[6,9,16], index: 2, kind: input, shape index: {}]
  %s3 = inlined_call_operand.vmem [shape: f32[6,9,16], index: 3, kind: output, shape index: {0}]
  %s4 = inlined_call_operand.hbm [shape: f32[6,4,16], index: 4, kind: output, shape index: {1}]
  %5 = xla_tuple %s3, %s4
  %s6 = sld [smem:[#allocation0]]
  $region53: #{tpu_custom_call.1} parent=0
    _
  %s8 = ssub.s32 1, %s6
  %s9 = scalar_select 0, %s8, %s6
  $region1: #{tpu_custom_call.1} parent=0
    #allocation2 [shape = 'u8[12288]{0}', space=vmem, size = 0x3000, scoped, tag = 'output window, operand 1']
    #allocation3 [shape = 's32[2]{0}', space=sflag, size = 0x8, scoped, tag = 'scoped memory for tpu_custom_call.1']
    %10 = vsyncpa [#allocation3], 0
    %s11 = scalar_lea.sflag [#allocation3], 1
    %12 = vsyncpa %s11, 0
    loop: start=0, step=1, limit=4
    $region2: #{tpu_custom_call.1} parent=1 // loop_pre_header
      _
    $region3: #{tpu_custom_call.1} parent=1 // loop_header
      %s14 = sphi 0, %s18
      %p15 = scmp.ge.s32.totalorder %s14, 4
      %s22 = sphi 0, %s22
      %s24 = sphi 0, %s22
      %s25 = sphi 0, %s24
      %s39 = sphi 0, %s25
      %s45 = sphi 0, %s47
      %s48 = sphi 0, %s45
      %s49 = sphi 0, %s48
      %s65 = sphi 0, %s49
      %s71 = sphi 0, %s73
      %s74 = sphi 0, %s71
      %s75 = sphi 0, %s74
      %s91 = sphi 0, %s75
      %s97 = sphi 0, %s99
      %s100 = sphi 0, %s97
      %s101 = sphi 0, %s100
      %s117 = sphi 0, %s101
      %s123 = sphi 0, %s125
      %s126 = sphi 0, %s123
      %s127 = sphi 0, %s126
      %s143 = sphi 0, %s127
    $region4: #{tpu_custom_call.1} parent=1 // loop_header_branch
      %17 = sbr.rel (%p15) target = $region8
    $region5: #{tpu_custom_call.1} parent=1 // loop_body
      %s19 = ssub.s32 %s14, 1
      %s20 = ssub.s32 %s14, 2
      %s21 = sadd.s32 %s14, 1
      %s23 = sadd.s32 %s22, 1
      %p26 = scmp.eq.s32.totalorder %s14, 1
      %p27 = scmp.ne.s32.totalorder %s22, %s24
      %p28 = scmp.eq.s32.totalorder %s14, 0
      %p29 = por %p27, %p28
      %p30 = scmp.ne.s32.totalorder %s22, %s24
      %p31 = scmp.eq.s32.totalorder %s19, 1
      %p32 = por %p30, %p31
      %p33 = scmp.ne.s32.totalorder %s24, %s25
      %p34 = scmp.eq.s32.totalorder %s19, 0
      %p35 = por %p33, %p34
      %p36 = scmp.ne.s32.totalorder %s24, %s25
      %p37 = scmp.eq.s32.totalorder %s20, 1
      %p38 = por %p36, %p37
      %p40 = scmp.ne.s32.totalorder %s25, %s39
      %p41 = scmp.eq.s32.totalorder %s20, 0
      %p42 = por %p40, %p41
      %s43 = ssub.s32 %s14, %s21
      %p44 = scmp.eq.s32.totalorder %s43, 0
      %s46 = sadd.s32 %s45, 1
      %s47 = scalar_select %p44, %s45, %s46
      %p50 = pneg %p44
      %p51 = scmp.eq.s32.totalorder %s14, 1
      %p52 = por %p50, %p51
      %p53 = scmp.ne.s32.totalorder %s45, %s48
      %p54 = scmp.eq.s32.totalorder %s14, 0
      %p55 = por %p53, %p54
      %p56 = scmp.ne.s32.totalorder %s45, %s48
      %p57 = scmp.eq.s32.totalorder %s19, 1
      %p58 = por %p56, %p57
      %p59 = scmp.ne.s32.totalorder %s48, %s49
      %p60 = scmp.eq.s32.totalorder %s19, 0
      %p61 = por %p59, %p60
      %p62 = scmp.ne.s32.totalorder %s48, %s49
      %p63 = scmp.eq.s32.totalorder %s20, 1
      %p64 = por %p62, %p63
      %p66 = scmp.ne.s32.totalorder %s49, %s65
      %p67 = scmp.eq.s32.totalorder %s20, 0
      %p68 = por %p66, %p67
      %s69 = ssub.s32 %s14, %s21
      %p70 = scmp.eq.s32.totalorder %s69, 0
      %s72 = sadd.s32 %s71, 1
      %s73 = scalar_select %p70, %s71, %s72
      %p76 = pneg %p70
      %p77 = scmp.eq.s32.totalorder %s14, 1
      %p78 = por %p76, %p77
      %p79 = scmp.ne.s32.totalorder %s71, %s74
      %p80 = scmp.eq.s32.totalorder %s14, 0
      %p81 = por %p79, %p80
      %p82 = scmp.ne.s32.totalorder %s71, %s74
      %p83 = scmp.eq.s32.totalorder %s19, 1
      %p84 = por %p82, %p83
      %p85 = scmp.ne.s32.totalorder %s74, %s75
      %p86 = scmp.eq.s32.totalorder %s19, 0
      %p87 = por %p85, %p86
      %p88 = scmp.ne.s32.totalorder %s74, %s75
      %p89 = scmp.eq.s32.totalorder %s20, 1
      %p90 = por %p88, %p89
      %p92 = scmp.ne.s32.totalorder %s75, %s91
      %p93 = scmp.eq.s32.totalorder %s20, 0
      %p94 = por %p92, %p93
      %s95 = ssub.s32 %s14, %s21
      %p96 = scmp.eq.s32.totalorder %s95, 0
      %s98 = sadd.s32 %s97, 1
      %s99 = scalar_select %p96, %s97, %s98
      %p102 = pneg %p96
      %p103 = scmp.eq.s32.totalorder %s14, 1
      %p104 = por %p102, %p103
      %p105 = scmp.ne.s32.totalorder %s97, %s100
      %p106 = scmp.eq.s32.totalorder %s14, 0
      %p107 = por %p105, %p106
      %p108 = scmp.ne.s32.totalorder %s97, %s100
      %p109 = scmp.eq.s32.totalorder %s19, 1
      %p110 = por %p108, %p109
      %p111 = scmp.ne.s32.totalorder %s100, %s101
      %p112 = scmp.eq.s32.totalorder %s19, 0
      %p113 = por %p111, %p112
      %p114 = scmp.ne.s32.totalorder %s100, %s101
      %p115 = scmp.eq.s32.totalorder %s20, 1
      %p116 = por %p114, %p115
      %p118 = scmp.ne.s32.totalorder %s101, %s117
      %p119 = scmp.eq.s32.totalorder %s20, 0
      %p120 = por %p118, %p119
      %s121 = ssub.s32 %s14, %s21
      %p122 = scmp.eq.s32.totalorder %s121, 0
      %s124 = sadd.s32 %s123, 1
      %s125 = scalar_select %p122, %s123, %s124
      %p128 = pneg %p122
      %p129 = scmp.eq.s32.totalorder %s14, 1
      %p130 = por %p128, %p129
      %p131 = scmp.ne.s32.totalorder %s123, %s126
      %p132 = scmp.eq.s32.totalorder %s14, 0
      %p133 = por %p131, %p132
      %p134 = scmp.ne.s32.totalorder %s123, %s126
      %p135 = scmp.eq.s32.totalorder %s19, 1
      %p136 = por %p134, %p135
      %p137 = scmp.ne.s32.totalorder %s126, %s127
      %p138 = scmp.eq.s32.totalorder %s19, 0
      %p139 = por %p137, %p138
      %p140 = scmp.ne.s32.totalorder %s126, %s127
      %p141 = scmp.eq.s32.totalorder %s20, 1
      %p142 = por %p140, %p141
      %p144 = scmp.ne.s32.totalorder %s127, %s143
      %p145 = scmp.eq.s32.totalorder %s20, 0
      %p146 = por %p144, %p145
      %p147 = scmp.le.s32.totalorder 1, %s14
      %p148 = scmp.lt.s32.totalorder %s14, 3
      %p149 = pnand %p147, %p148
      %p150 = pneg %p149
      // Predicated region
      $region9: #{tpu_custom_call.1} parent=5 // pred_check
        _
      $region10: #{tpu_custom_call.1} parent=5 // pred_check_branch
        %152 = sbr.rel (%p149) target = $region12
      $region11: #{tpu_custom_call.1} parent=5 // pred_region
        %s153 = ssub.s32 %s14, 1
        // Predicated region
        $region13: #{tpu_custom_call.1} parent=11 // pred_check
          %p154 = pneg %p35
        $region14: #{tpu_custom_call.1} parent=11 // pred_check_branch
          %156 = sbr.rel (%p154) target = $region16
        $region15: #{tpu_custom_call.1} parent=11 // pred_region
          _
        $region16: #{tpu_custom_call.1} parent=11 // pred_fallthru
          _
      $region12: #{tpu_custom_call.1} parent=5 // pred_fallthru
        _
      %p157 = scmp.lt.s32.totalorder %s14, 2
      // Predicated region
      $region17: #{tpu_custom_call.1} parent=5 // pred_check
        %p158 = pneg %p157
      $region18: #{tpu_custom_call.1} parent=5 // pred_check_branch
        %160 = sbr.rel (%p158) target = $region20
      $region19: #{tpu_custom_call.1} parent=5 // pred_region
        // Predicated region
        $region21: #{tpu_custom_call.1} parent=19 // pred_check
          %p161 = pneg %p55
        $region22: #{tpu_custom_call.1} parent=19 // pred_check_branch
          %163 = sbr.rel (%p161) target = $region24
        $region23: #{tpu_custom_call.1} parent=19 // pred_region
          %s164 = smul.u32 3, %s14
          %p165 = scmp.lt.s32.totalorder %s164, 5
          %s166 = scalar_select %p165, %s164, 5
          %s167 = smul.addr %s166, 4
          %s168 = scalar_lea.vmem %s1, %s167
          %s169 = smul.u32 3, %s14
        $region24: #{tpu_custom_call.1} parent=19 // pred_fallthru
          _
        // Predicated region
        $region25: #{tpu_custom_call.1} parent=19 // pred_check
          %p170 = pneg %p81
        $region26: #{tpu_custom_call.1} parent=19 // pred_check_branch
          %172 = sbr.rel (%p170) target = $region28
        $region27: #{tpu_custom_call.1} parent=19 // pred_region
          %s173 = smul.u32 3, %s14
          %p174 = scmp.lt.s32.totalorder %s173, 5
          %s175 = scalar_select %p174, %s173, 5
          %s176 = smul.addr %s175, 2
          %s177 = smul.addr %s176, 8
          %s178 = scalar_lea.vmem %s2, %s177
          %s179 = smul.u32 3, %s14
        $region28: #{tpu_custom_call.1} parent=19 // pred_fallthru
          _
      $region20: #{tpu_custom_call.1} parent=5 // pred_fallthru
        _
      %p180 = scmp.le.s32.totalorder 1, %s14
      %p181 = scmp.lt.s32.totalorder %s14, 3
      %p182 = pnand %p180, %p181
      %p183 = pneg %p182
      // Predicated region
      $region29: #{tpu_custom_call.1} parent=5 // pred_check
        _
      $region30: #{tpu_custom_call.1} parent=5 // pred_check_branch
        %185 = sbr.rel (%p182) target = $region32
      $region31: #{tpu_custom_call.1} parent=5 // pred_region
        %s186 = ssub.s32 %s14, 1
        %p187 = pneg %p35
        %p188 = pneg %p32
        %s189 = smul.u32 3, %s19
        %p190 = scmp.lt.s32.totalorder %s189, 5
        %s191 = scalar_select %p190, %s189, 5
        %s192 = smul.addr %s191, 4
        %s193 = scalar_lea.vmem %s1, %s192
        %p194 = pneg %p61
        %p195 = pneg %p58
        %s196 = smul.u32 3, %s19
        %p197 = scmp.lt.s32.totalorder %s196, 5
        %s198 = scalar_select %p197, %s196, 5
        %s199 = smul.addr %s198, 2
        %s200 = smul.addr %s199, 8
        %s201 = scalar_lea.vmem %s2, %s200
        %p202 = pneg %p87
        %p203 = pneg %p84
        %p204 = pneg %p113
        %p205 = pneg %p110
        %s206 = smul.u32 3, %s19
        %p207 = scmp.lt.s32.totalorder %s206, 5
        %s208 = scalar_select %p207, %s206, 5
        %s209 = smul.addr %s208, 2
        %s210 = smul.addr %s209, 8
        %s211 = scalar_lea.vmem %s3, %s210
        %p212 = pneg %p139
        %p213 = pneg %p136
        %s214 = sand.u32 %s126, 1
        %s215 = scalar_lea.sflag [#allocation3], %s214
        %s216 = sand.u32 %s126, 1
        %s217 = smul.addr %s216, 12
        %s218 = scalar_lea.vmem [#allocation2], %s217
        %s219 = smul.u32 3, %s19
        %p220 = scmp.lt.s32.totalorder %s219, 5
        %s221 = scalar_select %p220, %s219, 5
        %s222 = smul.addr %s221, 4
        %s223 = scalar_lea.vmem %s1, %s222
        %s224 = smul.u32 3, %s19
        %s225 = smul.u32 3, %s19
        %p226 = scmp.lt.s32.totalorder %s225, 5
        %s227 = scalar_select %p226, %s225, 5
        %s228 = smul.addr %s227, 2
        %s229 = smul.addr %s228, 8
        %s230 = scalar_lea.vmem %s2, %s229
        %s231 = smul.u32 3, %s19
        %s232 = smul.u32 3, %s19
        %p233 = scmp.lt.s32.totalorder %s232, 5
        %s234 = scalar_select %p233, %s232, 5
        %s235 = smul.addr %s234, 2
        %s236 = smul.addr %s235, 8
        %s237 = scalar_lea.vmem %s3, %s236
        %s238 = smul.u32 3, %s19
        %s239 = smul.u32 3, %s19
        %v240 = vld [vmem:[%s230] sm:$0xff]
        %v241 = vld [vmem:[%s230 + $0x8] sm:$0x1]
        %v242 = vld [vmem:[%s230 + $0x10] sm:$0xff]
        %v243 = vld [vmem:[%s230 + $0x18] sm:$0x1]
        %v244 = vld [vmem:[%s230 + $0x20] sm:$0xff]
        %v245 = vld [vmem:[%s230 + $0x28] sm:$0x1]
        %v246 = vsub.f32 0.0, %v240
        %v247 = vsub.f32 0.0, %v241
        %v248 = vsub.f32 0.0, %v242
        %v249 = vsub.f32 0.0, %v243
        %v250 = vsub.f32 0.0, %v244
        %v251 = vsub.f32 0.0, %v245
        %v252 = vmul.f32 %v246, 1.442695
        %v253 = vpow.pop %v252
        %v254 = vmul.f32 %v247, 1.442695
        %v255 = vpow.pop %v254
        %v256 = vmul.f32 %v248, 1.442695
        %v257 = vpow.pop %v256
        %v258 = vmul.f32 %v249, 1.442695
        %v259 = vpow.pop %v258
        %v260 = vmul.f32 %v250, 1.442695
        %v261 = vpow.pop %v260
        %v262 = vmul.f32 %v251, 1.442695
        %v263 = vpow.pop %v262
        %v264 = vadd.f32 %v253, 1.0
        %v265 = vadd.f32 %v255, 1.0
        %v266 = vadd.f32 %v257, 1.0
        %v267 = vadd.f32 %v259, 1.0
        %v268 = vadd.f32 %v261, 1.0
        %v269 = vadd.f32 %v263, 1.0
        %v270 = vrcp.pop %v264
        %v271 = vmul.f32 1.0, %v270
        %v272 = vrcp.pop %v265
        %v273 = vmul.f32 1.0, %v272
        %v274 = vrcp.pop %v266
        %v275 = vmul.f32 1.0, %v274
        %v276 = vrcp.pop %v267
        %v277 = vmul.f32 1.0, %v276
        %v278 = vrcp.pop %v268
        %v279 = vmul.f32 1.0, %v278
        %v280 = vrcp.pop %v269
        %v281 = vmul.f32 1.0, %v280
        %v282 = vlaneseq
        %v283 = vshrl.u32 %v282, 7
        %v284 = vadd.s32 %v283, 8
        %vm285 = vcmp.ge.s32.totalorder %v283, 2
        %vm286 = vcmp.ge.s32.totalorder %v284, 2
        %vm287 = vcmp.lt.s32.totalorder %v283, 4
        %vm288 = vcmp.lt.s32.totalorder %v284, 4
        %vm289 = vmand %vm285, %vm287
        %vm290 = vmand %vm286, %vm288
        %v291 = vsel %vm289, %v240, %v271
        %v292 = vsel %vm290, %v241, %v273
        %v293 = vsel %vm289, %v242, %v275
        %v294 = vsel %vm290, %v243, %v277
        %v295 = vsel %vm289, %v244, %v279
        %v296 = vsel %vm290, %v245, %v281
        %vm297 = vcmp.lt.s32.totalorder %v283, 2
        %v298 = vld [vmem:[%s0] sm:$0xf]
        %v299 = vadd.f32 %v271, %v298
        %v300 = vadd.f32 %v275, %v298
        %v301 = vadd.f32 %v279, %v298
        %v302 = vmul.f32 %v240, 1.442695
        %v303 = vpow.pop %v302
        %v304 = vmul.f32 %v242, 1.442695
        %v305 = vpow.pop %v304
        %v306 = vmul.f32 %v244, 1.442695
        %v307 = vpow.pop %v306
        %v308 = vsel %vm297, %v299, %v303
        %v309 = vsel %vm297, %v300, %v305
        %v310 = vsel %vm297, %v301, %v307
        %v311 = vld [vmem:[%s223] sm:$0xf]
        %v312 = vld [vmem:[%s223 + $0x4] sm:$0xf]
        %v313 = vld [vmem:[%s223 + $0x8] sm:$0xf]
        %315 = vset.pattern.permute.xlu0 0
        %316 = vperm.xlu0 %315, %v311
        %v317 = vpop.permute.xlu0 %316
        %320 = vset.pattern.permute.xlu0 0
        %321 = vperm.xlu0 %320, %v312
        %v322 = vpop.permute.xlu0 %321
        %325 = vset.pattern.permute.xlu0 0
        %326 = vperm.xlu0 %325, %v313
        %v327 = vpop.permute.xlu0 %326
        %v329 = vmul.f32 %v308, %v317
        %v330 = vmul.f32 %v309, %v322
        %v331 = vmul.f32 %v310, %v327
        %vm332 = vcmask 130048
        %333 = vst.msk [vmem:[%s237] sm:$0xff] %vm332, %v291
        %vm334 = vcmask 122880
        %335 = vst.msk [vmem:[%s237 + $0x8] sm:$0x1] %vm334, %v292
        %336 = vst.msk [vmem:[%s237 + $0x10] sm:$0xff] %vm332, %v293
        %337 = vst.msk [vmem:[%s237 + $0x18] sm:$0x1] %vm334, %v294
        %338 = vst.msk [vmem:[%s237 + $0x20] sm:$0xff] %vm332, %v295
        %339 = vst.msk [vmem:[%s237 + $0x28] sm:$0x1] %vm334, %v296
        %vm340 = vcmask 125952
        %341 = vst.msk [vmem:[%s218] sm:$0xf] %vm340, %v329
        %342 = vst.msk [vmem:[%s218 + $0x4] sm:$0xf] %vm340, %v330
        %343 = vst.msk [vmem:[%s218 + $0x8] sm:$0xf] %vm340, %v331
        %s344 = smul.u32 3, %s19
        %p345 = scmp.lt.s32.totalorder %s344, 5
        %s346 = scalar_select %p345, %s344, 5
        %s347 = smul.addr %s346, 2
        %s348 = smul.addr %s347, 8
        %s349 = scalar_lea.vmem %s3, %s348
        %s350 = sand.u32 %s126, 1
        %s351 = scalar_lea.sflag [#allocation3], %s350
        %s352 = sand.u32 %s126, 1
        %s353 = smul.addr %s352, 12
        %s354 = scalar_lea.vmem [#allocation2], %s353
        // Predicated region
        $region33: #{tpu_custom_call.1} parent=31 // pred_check
          %p355 = pneg %p110
        $region34: #{tpu_custom_call.1} parent=31 // pred_check_branch
          %357 = sbr.rel (%p355) target = $region36
        $region35: #{tpu_custom_call.1} parent=31 // pred_region
          %s358 = smul.u32 3, %s19
        $region36: #{tpu_custom_call.1} parent=31 // pred_fallthru
          _
        // Predicated region
        $region37: #{tpu_custom_call.1} parent=31 // pred_check
          %p359 = pneg %p136
        $region38: #{tpu_custom_call.1} parent=31 // pred_check_branch
          %361 = sbr.rel (%p359) target = $region40
        $region39: #{tpu_custom_call.1} parent=31 // pred_region
          %s362 = smul.u32 3, %s19
          %s364 = ssub.s32 192, 192
          %365 = vsyncadd %s351, %s364
          %s366 = smul.addr %s362, 64
          %s367 = scalar_lea.hbm %s4, %s366
          %s368 = sshll.u32 %s354, 4
          %s369 = int_to_ptr.vmem [resolvable:$true] %s368
          %374 = dma.vmem_to_hbm [thread:$0]  %s369, 192, %s367, %s351, 64, 64, 4
        $region40: #{tpu_custom_call.1} parent=31 // pred_fallthru
          _
      $region32: #{tpu_custom_call.1} parent=5 // pred_fallthru
        _
      %p375 = scmp.le.s32.totalorder 2, %s14
      // Predicated region
      $region41: #{tpu_custom_call.1} parent=5 // pred_check
        %p376 = pneg %p375
      $region42: #{tpu_custom_call.1} parent=5 // pred_check_branch
        %378 = sbr.rel (%p376) target = $region44
      $region43: #{tpu_custom_call.1} parent=5 // pred_region
        %s379 = ssub.s32 %s14, 2
        // Predicated region
        $region45: #{tpu_custom_call.1} parent=43 // pred_check
          %p380 = pneg %p116
        $region46: #{tpu_custom_call.1} parent=43 // pred_check_branch
          %382 = sbr.rel (%p380) target = $region48
        $region47: #{tpu_custom_call.1} parent=43 // pred_region
          %s383 = smul.u32 3, %s20
          %p384 = scmp.lt.s32.totalorder %s383, 5
          %s385 = scalar_select %p384, %s383, 5
          %s386 = smul.addr %s385, 2
          %s387 = smul.addr %s386, 8
          %s388 = scalar_lea.vmem %s3, %s387
        $region48: #{tpu_custom_call.1} parent=43 // pred_fallthru
          _
        // Predicated region
        $region49: #{tpu_custom_call.1} parent=43 // pred_check
          %p389 = pneg %p142
        $region50: #{tpu_custom_call.1} parent=43 // pred_check_branch
          %391 = sbr.rel (%p389) target = $region52
        $region51: #{tpu_custom_call.1} parent=43 // pred_region
          %s392 = sand.u32 %s127, 1
          %s393 = scalar_lea.sflag [#allocation3], %s392
          %s394 = sand.u32 %s127, 1
          %s395 = smul.addr %s394, 12
          %s396 = scalar_lea.vmem [#allocation2], %s395
          %397 = dma.done %s393, 192
        $region52: #{tpu_custom_call.1} parent=43 // pred_fallthru
          _
      $region44: #{tpu_custom_call.1} parent=5 // pred_fallthru
        _
    $region6: #{tpu_custom_call.1} parent=1 // loop_footer
      %s18 = sadd.s32 1, %s14
    $region7: #{tpu_custom_call.1} parent=1 // loop_footer_branch
      %13 = sbr.rel target = $region3
    $region8: #{tpu_custom_call.1} parent=1 // loop_exit
      _
    %398 = vsyncpa [#allocation3], 1
    %s399 = scalar_lea.sflag [#allocation3], 1
    %400 = vsyncpa %s399, 1

</llo_original>
